<compile_context>
chip_gen: v5e
topology: v5e:2x2
jax: 0.10.0
libtpu: 0.0.40
codegen_flags: <defaults>
</compile_context>

<pallas_src>
import jax
import jax.numpy as jnp
from jax.experimental import pallas as pl
from jax.experimental.pallas import tpu as pltpu

# Small, TPU-tile-friendly test hyperparameters (module defaults are 1024/1024/4)
CROSS_ATTENTION_DIM = 128      # C  (multiple of the 128-lane width)
CLIP_EMBEDDINGS_DIM = 256      # E
CLIP_EXTRA_CONTEXT_TOKENS = 4  # T
LN_EPS = 1e-5                  # torch.nn.LayerNorm default


def _round_up(x, m):
    return ((x + m - 1) // m) * m


def _make_kernel(num_tokens: int, cross_dim: int):
    def kernel(x_ref, w_ref, b_ref, gamma_ref, beta_ref, o_ref):
        # x_ref:     (TB, E)    f32 batch tile of image embeddings
        # w_ref:     (E, T*C)   bf16 proj weight (transposed to in x out)
        # b_ref:     (1, T*C)   f32 proj bias
        # gamma_ref: (1, T*C)   f32 LayerNorm weight, pre-tiled across tokens
        # beta_ref:  (1, T*C)   f32 LayerNorm bias, pre-tiled across tokens
        # o_ref:     (TB, T*C)  lane-dense output slab
        x = x_ref[...].astype(jnp.bfloat16)
        # Hot path: bf16 MXU matmul, f32 accumulation, bias add in f32 (VPU).
        y = jnp.dot(x, w_ref[...], preferred_element_type=jnp.float32) + b_ref[...]

        # LayerNorm over each token's C-wide slice. Static unroll over T; every
        # slice is lane-aligned (C % 128 == 0) so slicing is free. Stats in f32.
        parts = []
        for t in range(num_tokens):
            yt = y[:, t * cross_dim:(t + 1) * cross_dim]            # (TB, C)
            mean = jnp.mean(yt, axis=-1, keepdims=True)             # XLU reduce
            centered = yt - mean
            var = jnp.mean(centered * centered, axis=-1, keepdims=True)
            parts.append(centered * jax.lax.rsqrt(var + LN_EPS))    # EUP rsqrt
        normed = jnp.concatenate(parts, axis=-1)                    # (TB, T*C)

        # Single fused affine (pre-tiled gamma/beta) + ONE unmasked store.
        o_ref[...] = (normed * gamma_ref[...] + beta_ref[...]).astype(o_ref.dtype)

    return kernel


def image_proj_model_forward(image_embeds, proj_w, proj_b, ln_gamma, ln_beta,
                             *, num_tokens=CLIP_EXTRA_CONTEXT_TOKENS,
                             cross_dim=CROSS_ATTENTION_DIM,
                             batch_tile=256):
    """image_embeds: (B, E) -> (B, T, C). Matches ImageProjModel.forward."""
    B, E = image_embeds.shape
    TC = num_tokens * cross_dim
    assert proj_w.shape == (TC, E)          # torch Linear stores (out, in)

    # Weight transposed to (E, T*C) and cast to bf16 (MXU-native, half the DMA).
    w = proj_w.T.astype(jnp.bfloat16)
    b = proj_b.reshape(1, TC).astype(jnp.float32)
    # Pre-tile LN affine params to (1, T*C): one hoisted broadcast, applied once.
    gamma = jnp.tile(ln_gamma.reshape(1, cross_dim).astype(jnp.float32),
                     (1, num_tokens))
    beta = jnp.tile(ln_beta.reshape(1, cross_dim).astype(jnp.float32),
                    (1, num_tokens))

    # Batch tiling: as large as B allows (fills MXU rows, amortizes the ~0.35us
    # per-grid-step overhead). Pad batch with zero rows to a multiple of the
    # tile; padded rows are pure throwaway compute and are sliced off below.
    bt = min(batch_tile, _round_up(B, 8))
    b_pad = _round_up(B, bt)
    x = image_embeds
    if b_pad != B:
        x = jnp.pad(x, ((0, b_pad - B), (0, 0)))
    grid = (b_pad // bt,)

    kernel = _make_kernel(num_tokens, cross_dim)
    itemsize = jnp.dtype(image_embeds.dtype).itemsize
    cost = pl.CostEstimate(
        flops=2 * b_pad * E * TC,
        transcendentals=0,
        bytes_accessed=(b_pad * E * itemsize       # x
                        + E * TC * 2               # bf16 weight
                        + 3 * TC * 4               # bias + gamma + beta
                        + b_pad * TC * itemsize),  # output slab
    )

    grid_spec = pltpu.PrefetchScalarGridSpec(
        num_scalar_prefetch=0,
        grid=grid,
        in_specs=[
            pl.BlockSpec((bt, E), lambda i: (i, 0)),     # batch tile
            pl.BlockSpec((E, TC), lambda i: (0, 0)),     # grid-invariant weight
            pl.BlockSpec((1, TC), lambda i: (0, 0)),     # bias
            pl.BlockSpec((1, TC), lambda i: (0, 0)),     # gamma (tiled)
            pl.BlockSpec((1, TC), lambda i: (0, 0)),     # beta  (tiled)
        ],
        out_specs=pl.BlockSpec((bt, TC), lambda i: (i, 0)),
    )

    out = pl.pallas_call(
        kernel,
        out_shape=jax.ShapeDtypeStruct((b_pad, TC), image_embeds.dtype),
        grid_spec=grid_spec,
        compiler_params=pltpu.CompilerParams(
            dimension_semantics=("parallel",)),
        cost_estimate=cost,
    )(x, w, b, gamma, beta)

    # Free layout plumbing: strip batch padding, reshape slab to (B, T, C).
    return out[:B].reshape(B, num_tokens, cross_dim)


def _reference(image_embeds, proj_w, proj_b, ln_gamma, ln_beta,
               num_tokens=CLIP_EXTRA_CONTEXT_TOKENS,
               cross_dim=CROSS_ATTENTION_DIM,
               matmul_dtype=jnp.float32):
    y = jnp.dot(image_embeds.astype(matmul_dtype),
                proj_w.T.astype(matmul_dtype),
                preferred_element_type=jnp.float32) + proj_b
    y = y.reshape(-1, num_tokens, cross_dim)
    mean = jnp.mean(y, axis=-1, keepdims=True)
    var = jnp.mean((y - mean) ** 2, axis=-1, keepdims=True)
    return (y - mean) / jnp.sqrt(var + LN_EPS) * ln_gamma + ln_beta


if __name__ == "__main__":
    B = 16
    E = CLIP_EMBEDDINGS_DIM
    C = CROSS_ATTENTION_DIM
    T = CLIP_EXTRA_CONTEXT_TOKENS

    key = jax.random.PRNGKey(0)
    k_x, k_w, k_b = jax.random.split(key, 3)

    # Deterministic parameter init (synthetic; not loaded from a checkpoint).
    image_embeds = jax.random.normal(k_x, (B, E), dtype=jnp.float32)
    proj_w = jax.random.normal(k_w, (T * C, E), dtype=jnp.float32) * 0.02
    proj_b = jax.random.normal(k_b, (T * C,), dtype=jnp.float32) * 0.01
    ln_gamma = jnp.ones((C,), dtype=jnp.float32)   # torch LayerNorm init
    ln_beta = jnp.zeros((C,), dtype=jnp.float32)

    out = image_proj_model_forward(image_embeds, proj_w, proj_b,
                                   ln_gamma, ln_beta)
    out = jax.block_until_ready(out)
    assert out.shape == (B, T, C)

    # Tight check against a reference with the kernel's bf16-matmul numerics.
    ref_bf16 = _reference(image_embeds, proj_w, proj_b, ln_gamma, ln_beta,
                          matmul_dtype=jnp.bfloat16)
    assert jnp.allclose(out, ref_bf16, atol=2e-3, rtol=2e-3), \
        float(jnp.max(jnp.abs(out - ref_bf16)))

    # Loose check against the full-f32 PyTorch-equivalent reference
    # (LayerNorm renormalizes, so the bf16 matmul error stays small).
    ref_f32 = _reference(image_embeds, proj_w, proj_b, ln_gamma, ln_beta,
                         matmul_dtype=jnp.float32)
    assert jnp.allclose(out, ref_f32, atol=5e-2, rtol=5e-2)

    print("KERNEL_OK")
</pallas_src>

<mosaic_0001>
module attributes {stable_mosaic.version = 11 : i64} {
  func.func @kernel(%arg0: i32, %arg1: memref<16x256xf32, #tpu.memory_space<vmem>>, %arg2: memref<256x512xbf16, #tpu.memory_space<vmem>>, %arg3: memref<1x512xf32, #tpu.memory_space<vmem>>, %arg4: memref<1x512xf32, #tpu.memory_space<vmem>>, %arg5: memref<1x512xf32, #tpu.memory_space<vmem>>, %arg6: memref<16x512xf32, #tpu.memory_space<vmem>>) attributes {dimension_semantics = [#tpu.dimension_semantics<parallel>], iteration_bounds = array<i64: 1>, scalar_prefetch = 0 : i64, scratch_operands = 0 : i64, tpu.core_type = #tpu.core_type<tc>, window_params = [{transform_indices = @transform_0, window_bounds = array<i64: 16, 256>}, {pipeline_mode = #tpu.pipeline_mode<synchronous>, transform_indices = @transform_1, window_bounds = array<i64: 256, 512>}, {pipeline_mode = #tpu.pipeline_mode<synchronous>, transform_indices = @transform_2, window_bounds = array<i64: 1, 512>}, {pipeline_mode = #tpu.pipeline_mode<synchronous>, transform_indices = @transform_3, window_bounds = array<i64: 1, 512>}, {pipeline_mode = #tpu.pipeline_mode<synchronous>, transform_indices = @transform_4, window_bounds = array<i64: 1, 512>}, {transform_indices = @transform_5, window_bounds = array<i64: 16, 512>}]} {
    %c0 = arith.constant 0 : index
    %c0_0 = arith.constant 0 : index
    %0 = vector.load %arg1[%c0, %c0_0] : memref<16x256xf32, #tpu.memory_space<vmem>>, vector<16x256xf32>
    %1 = arith.truncf %0 : vector<16x256xf32> to vector<16x256xbf16>
    %c0_1 = arith.constant 0 : index
    %c0_2 = arith.constant 0 : index
    %2 = vector.load %arg2[%c0_1, %c0_2] : memref<256x512xbf16, #tpu.memory_space<vmem>>, vector<256x512xbf16>
    %cst = arith.constant dense<0.000000e+00> : vector<16x512xf32>
    %3 = tpu.matmul %1, %2, %cst {dimension_numbers = #tpu.dot_dimension_numbers<[1], [0], [0], [1], [0, 0, 1, 1], [], []>} : vector<16x256xbf16>, vector<256x512xbf16>, vector<16x512xf32> -> vector<16x512xf32>
    %c0_3 = arith.constant 0 : index
    %c0_4 = arith.constant 0 : index
    %4 = vector.load %arg3[%c0_3, %c0_4] : memref<1x512xf32, #tpu.memory_space<vmem>>, vector<1x512xf32>
    %5 = vector.broadcast %4 : vector<1x512xf32> to vector<16x512xf32>
    %6 = arith.addf %3, %5 : vector<16x512xf32>
    %7 = vector.extract_strided_slice %6 {offsets = [0, 0], sizes = [16, 128], strides = [1, 1]} : vector<16x512xf32> to vector<16x128xf32>
    %cst_5 = arith.constant dense<0.000000e+00> : vector<16xf32>
    %8 = vector.multi_reduction <add>, %7, %cst_5 [1] : vector<16x128xf32> to vector<16xf32>
    %9 = vector.shape_cast %8 : vector<16xf32> to vector<16x1xf32>
    %cst_6 = arith.constant 1.280000e+02 : f32
    %10 = vector.broadcast %cst_6 : f32 to vector<16x1xf32>
    %11 = arith.divf %9, %10 : vector<16x1xf32>
    %12 = vector.broadcast %11 : vector<16x1xf32> to vector<16x128xf32>
    %13 = arith.subf %7, %12 : vector<16x128xf32>
    %14 = arith.mulf %13, %13 : vector<16x128xf32>
    %cst_7 = arith.constant dense<0.000000e+00> : vector<16xf32>
    %15 = vector.multi_reduction <add>, %14, %cst_7 [1] : vector<16x128xf32> to vector<16xf32>
    %16 = vector.shape_cast %15 : vector<16xf32> to vector<16x1xf32>
    %cst_8 = arith.constant 1.280000e+02 : f32
    %17 = vector.broadcast %cst_8 : f32 to vector<16x1xf32>
    %18 = arith.divf %16, %17 : vector<16x1xf32>
    %cst_9 = arith.constant 9.99999974E-6 : f32
    %19 = vector.broadcast %cst_9 : f32 to vector<16x1xf32>
    %20 = arith.addf %18, %19 : vector<16x1xf32>
    %21 = math.rsqrt %20 : vector<16x1xf32>
    %22 = vector.broadcast %21 : vector<16x1xf32> to vector<16x128xf32>
    %23 = arith.mulf %13, %22 : vector<16x128xf32>
    %24 = vector.extract_strided_slice %6 {offsets = [0, 128], sizes = [16, 128], strides = [1, 1]} : vector<16x512xf32> to vector<16x128xf32>
    %cst_10 = arith.constant dense<0.000000e+00> : vector<16xf32>
    %25 = vector.multi_reduction <add>, %24, %cst_10 [1] : vector<16x128xf32> to vector<16xf32>
    %26 = vector.shape_cast %25 : vector<16xf32> to vector<16x1xf32>
    %cst_11 = arith.constant 1.280000e+02 : f32
    %27 = vector.broadcast %cst_11 : f32 to vector<16x1xf32>
    %28 = arith.divf %26, %27 : vector<16x1xf32>
    %29 = vector.broadcast %28 : vector<16x1xf32> to vector<16x128xf32>
    %30 = arith.subf %24, %29 : vector<16x128xf32>
    %31 = arith.mulf %30, %30 : vector<16x128xf32>
    %cst_12 = arith.constant dense<0.000000e+00> : vector<16xf32>
    %32 = vector.multi_reduction <add>, %31, %cst_12 [1] : vector<16x128xf32> to vector<16xf32>
    %33 = vector.shape_cast %32 : vector<16xf32> to vector<16x1xf32>
    %cst_13 = arith.constant 1.280000e+02 : f32
    %34 = vector.broadcast %cst_13 : f32 to vector<16x1xf32>
    %35 = arith.divf %33, %34 : vector<16x1xf32>
    %cst_14 = arith.constant 9.99999974E-6 : f32
    %36 = vector.broadcast %cst_14 : f32 to vector<16x1xf32>
    %37 = arith.addf %35, %36 : vector<16x1xf32>
    %38 = math.rsqrt %37 : vector<16x1xf32>
    %39 = vector.broadcast %38 : vector<16x1xf32> to vector<16x128xf32>
    %40 = arith.mulf %30, %39 : vector<16x128xf32>
    %41 = vector.extract_strided_slice %6 {offsets = [0, 256], sizes = [16, 128], strides = [1, 1]} : vector<16x512xf32> to vector<16x128xf32>
    %cst_15 = arith.constant dense<0.000000e+00> : vector<16xf32>
    %42 = vector.multi_reduction <add>, %41, %cst_15 [1] : vector<16x128xf32> to vector<16xf32>
    %43 = vector.shape_cast %42 : vector<16xf32> to vector<16x1xf32>
    %cst_16 = arith.constant 1.280000e+02 : f32
    %44 = vector.broadcast %cst_16 : f32 to vector<16x1xf32>
    %45 = arith.divf %43, %44 : vector<16x1xf32>
    %46 = vector.broadcast %45 : vector<16x1xf32> to vector<16x128xf32>
    %47 = arith.subf %41, %46 : vector<16x128xf32>
    %48 = arith.mulf %47, %47 : vector<16x128xf32>
    %cst_17 = arith.constant dense<0.000000e+00> : vector<16xf32>
    %49 = vector.multi_reduction <add>, %48, %cst_17 [1] : vector<16x128xf32> to vector<16xf32>
    %50 = vector.shape_cast %49 : vector<16xf32> to vector<16x1xf32>
    %cst_18 = arith.constant 1.280000e+02 : f32
    %51 = vector.broadcast %cst_18 : f32 to vector<16x1xf32>
    %52 = arith.divf %50, %51 : vector<16x1xf32>
    %cst_19 = arith.constant 9.99999974E-6 : f32
    %53 = vector.broadcast %cst_19 : f32 to vector<16x1xf32>
    %54 = arith.addf %52, %53 : vector<16x1xf32>
    %55 = math.rsqrt %54 : vector<16x1xf32>
    %56 = vector.broadcast %55 : vector<16x1xf32> to vector<16x128xf32>
    %57 = arith.mulf %47, %56 : vector<16x128xf32>
    %58 = vector.extract_strided_slice %6 {offsets = [0, 384], sizes = [16, 128], strides = [1, 1]} : vector<16x512xf32> to vector<16x128xf32>
    %cst_20 = arith.constant dense<0.000000e+00> : vector<16xf32>
    %59 = vector.multi_reduction <add>, %58, %cst_20 [1] : vector<16x128xf32> to vector<16xf32>
    %60 = vector.shape_cast %59 : vector<16xf32> to vector<16x1xf32>
    %cst_21 = arith.constant 1.280000e+02 : f32
    %61 = vector.broadcast %cst_21 : f32 to vector<16x1xf32>
    %62 = arith.divf %60, %61 : vector<16x1xf32>
    %63 = vector.broadcast %62 : vector<16x1xf32> to vector<16x128xf32>
    %64 = arith.subf %58, %63 : vector<16x128xf32>
    %65 = arith.mulf %64, %64 : vector<16x128xf32>
    %cst_22 = arith.constant dense<0.000000e+00> : vector<16xf32>
    %66 = vector.multi_reduction <add>, %65, %cst_22 [1] : vector<16x128xf32> to vector<16xf32>
    %67 = vector.shape_cast %66 : vector<16xf32> to vector<16x1xf32>
    %cst_23 = arith.constant 1.280000e+02 : f32
    %68 = vector.broadcast %cst_23 : f32 to vector<16x1xf32>
    %69 = arith.divf %67, %68 : vector<16x1xf32>
    %cst_24 = arith.constant 9.99999974E-6 : f32
    %70 = vector.broadcast %cst_24 : f32 to vector<16x1xf32>
    %71 = arith.addf %69, %70 : vector<16x1xf32>
    %72 = math.rsqrt %71 : vector<16x1xf32>
    %73 = vector.broadcast %72 : vector<16x1xf32> to vector<16x128xf32>
    %74 = arith.mulf %64, %73 : vector<16x128xf32>
    %75 = tpu.concatenate %23, %40, %57, %74 in 1 : vector<16x128xf32>, vector<16x128xf32>, vector<16x128xf32>, vector<16x128xf32> -> vector<16x512xf32>
    %c0_25 = arith.constant 0 : index
    %c0_26 = arith.constant 0 : index
    %76 = vector.load %arg4[%c0_25, %c0_26] : memref<1x512xf32, #tpu.memory_space<vmem>>, vector<1x512xf32>
    %77 = vector.broadcast %76 : vector<1x512xf32> to vector<16x512xf32>
    %78 = arith.mulf %75, %77 : vector<16x512xf32>
    %c0_27 = arith.constant 0 : index
    %c0_28 = arith.constant 0 : index
    %79 = vector.load %arg5[%c0_27, %c0_28] : memref<1x512xf32, #tpu.memory_space<vmem>>, vector<1x512xf32>
    %80 = vector.broadcast %79 : vector<1x512xf32> to vector<16x512xf32>
    %81 = arith.addf %78, %80 : vector<16x512xf32>
    %c0_29 = arith.constant 0 : index
    %c0_30 = arith.constant 0 : index
    %82 = vector.load %arg6[%c0_29, %c0_30] : memref<16x512xf32, #tpu.memory_space<vmem>>, vector<16x512xf32>
    tpu.vector_store %arg6[%c0_29, %c0_30], %81 {strides = array<i32>} : memref<16x512xf32, #tpu.memory_space<vmem>>, vector<16x512xf32>,
    return
  }
  func.func @transform_0(%arg0: i32) -> (i32, i32) {
    %c0_i32 = arith.constant 0 : i32
    %c0_i32_0 = arith.constant 0 : i32
    return %arg0, %c0_i32 : i32, i32
  }
  func.func @transform_1(%arg0: i32) -> (i32, i32) {
    %c0_i32 = arith.constant 0 : i32
    %c0_i32_0 = arith.constant 0 : i32
    %c0_i32_1 = arith.constant 0 : i32
    return %c0_i32, %c0_i32_0 : i32, i32
  }
  func.func @transform_2(%arg0: i32) -> (i32, i32) {
    %c0_i32 = arith.constant 0 : i32
    %c0_i32_0 = arith.constant 0 : i32
    %c0_i32_1 = arith.constant 0 : i32
    return %c0_i32, %c0_i32_0 : i32, i32
  }
  func.func @transform_3(%arg0: i32) -> (i32, i32) {
    %c0_i32 = arith.constant 0 : i32
    %c0_i32_0 = arith.constant 0 : i32
    %c0_i32_1 = arith.constant 0 : i32
    return %c0_i32, %c0_i32_0 : i32, i32
  }
  func.func @transform_4(%arg0: i32) -> (i32, i32) {
    %c0_i32 = arith.constant 0 : i32
    %c0_i32_0 = arith.constant 0 : i32
    %c0_i32_1 = arith.constant 0 : i32
    return %c0_i32, %c0_i32_0 : i32, i32
  }
  func.func @transform_5(%arg0: i32) -> (i32, i32) {
    %c0_i32 = arith.constant 0 : i32
    %c0_i32_0 = arith.constant 0 : i32
    return %arg0, %c0_i32 : i32, i32
  }
}

</mosaic_0001>

<llo_original>
// kernel: tpu_custom_call.1
$region0: #{tpu_custom_call.1}
  #allocation0 [shape = 'u32[]', space=smem, size = 0x4, offset = 0x4, fixed_abs, tag = 'smem constant byte address 0x4 - core index']
  #allocation1 [shape = 'u32[72,128]{1,0:T(1,128)}', space=vmem, size = 0x9000, scoped, tag = 'internal scratch']
  %s0 = inlined_call_operand.hbm [shape: f32[16,256], index: 0, kind: input, shape index: {}]
  %s1 = inlined_call_operand.hbm [shape: bf16[256,512], index: 1, kind: input, shape index: {}]
  %s2 = inlined_call_operand.hbm [shape: f32[1,512], index: 2, kind: input, shape index: {}]
  %s3 = inlined_call_operand.hbm [shape: f32[1,512], index: 3, kind: input, shape index: {}]
  %s4 = inlined_call_operand.hbm [shape: f32[1,512], index: 4, kind: input, shape index: {}]
  %s5 = inlined_call_operand.hbm [shape: f32[16,512], index: 5, kind: output, shape index: {}]
  %s6 = sld [smem:[#allocation0]]
  $region50: #{tpu_custom_call.1} parent=0
    _
  %s8 = ssub.s32 1, %s6
  %s9 = scalar_select 0, %s8, %s6
  $region1: #{tpu_custom_call.1} parent=0
    #allocation2 [shape = 'u8[16384]{0}', space=vmem, size = 0x4000, scoped, tag = 'input window, operand 0, single buffered']
    #allocation3 [shape = 's32[1]{0}', space=sflag, size = 0x4, scoped, tag = 'scoped memory for tpu_custom_call.1']
    #allocation4 [shape = 's32[1]{0}', space=sflag, size = 0x4, scoped, tag = 'scoped memory for tpu_custom_call.1']
    #allocation5 [shape = 'u8[262144]{0}', space=vmem, size = 0x40000, scoped, tag = 'input window, operand 1, single buffered']
    #allocation6 [shape = 's32[1]{0}', space=sflag, size = 0x4, scoped, tag = 'scoped memory for tpu_custom_call.1']
    #allocation7 [shape = 'u8[2048]{0}', space=vmem, size = 0x800, scoped, tag = 'input window, operand 2, single buffered']
    #allocation8 [shape = 'u8[2048]{0}', space=vmem, size = 0x800, scoped, tag = 'input window, operand 3, single buffered']
    #allocation9 [shape = 's32[1]{0}', space=sflag, size = 0x4, scoped, tag = 'scoped memory for tpu_custom_call.1']
    #allocation10 [shape = 'u8[2048]{0}', space=vmem, size = 0x800, scoped, tag = 'input window, operand 4, single buffered']
    #allocation11 [shape = 'u8[32768]{0}', space=vmem, size = 0x8000, scoped, tag = 'output window, operand 0, single buffered']
    %10 = vsyncpa [#allocation3], 0
    %11 = vsyncpa [#allocation6], 0
    %12 = vsyncpa [#allocation9], 0
    %13 = vsyncpa [#allocation4], 0
    // Predicated region
    $region2: #{tpu_custom_call.1} parent=1 // pred_check
      _
    $region3: #{tpu_custom_call.1} parent=1 // pred_check_branch
      %15 = sbr.rel (0) target = $region5
    $region4: #{tpu_custom_call.1} parent=1 // pred_region
      %17 = vsyncadd [#allocation3], 0
      %s18 = sshll.u32 %s0, 4
      %s19 = int_to_ptr.hbm [resolvable:$true] %s18
      %s20 = sshll.u32 [#allocation2], 4
      %s21 = int_to_ptr.vmem [resolvable:$true] %s20
      %26 = dma.hbm_to_vmem [thread:$0]  %s19, 512, %s21, [#allocation3], 256, 256, 16
    $region5: #{tpu_custom_call.1} parent=1 // pred_fallthru
      _
    // Predicated region
    $region6: #{tpu_custom_call.1} parent=1 // pred_check
      _
    $region7: #{tpu_custom_call.1} parent=1 // pred_check_branch
      %28 = sbr.rel (0) target = $region9
    $region8: #{tpu_custom_call.1} parent=1 // pred_region
      %30 = vsyncadd [#allocation6], 0
      %s31 = sshll.u32 %s1, 4
      %s32 = int_to_ptr.hbm [resolvable:$true] %s31
      %s33 = sshll.u32 [#allocation5], 4
      %s34 = int_to_ptr.vmem [resolvable:$true] %s33
      %39 = dma.hbm_to_vmem [thread:$0]  %s32, 8192, %s34, [#allocation6], 256, 256, 16
    $region9: #{tpu_custom_call.1} parent=1 // pred_fallthru
      _
    // Predicated region
    $region10: #{tpu_custom_call.1} parent=1 // pred_check
      _
    $region11: #{tpu_custom_call.1} parent=1 // pred_check_branch
      %41 = sbr.rel (0) target = $region13
    $region12: #{tpu_custom_call.1} parent=1 // pred_region
      %43 = vsyncadd [#allocation6], 0
      %s45 = sshll.u32 %s2, 4
      %s46 = int_to_ptr.hbm [resolvable:$true] %s45
      %s47 = sshll.u32 [#allocation7], 4
      %s48 = int_to_ptr.vmem [resolvable:$true] %s47
      %50 = dma.hbm_to_vmem [thread:$0]  %s46, 64, %s48, [#allocation6]
    $region13: #{tpu_custom_call.1} parent=1 // pred_fallthru
      _
    // Predicated region
    $region14: #{tpu_custom_call.1} parent=1 // pred_check
      _
    $region15: #{tpu_custom_call.1} parent=1 // pred_check_branch
      %52 = sbr.rel (0) target = $region17
    $region16: #{tpu_custom_call.1} parent=1 // pred_region
      %54 = vsyncadd [#allocation9], 0
      %s56 = sshll.u32 %s3, 4
      %s57 = int_to_ptr.hbm [resolvable:$true] %s56
      %s58 = sshll.u32 [#allocation8], 4
      %s59 = int_to_ptr.vmem [resolvable:$true] %s58
      %61 = dma.hbm_to_vmem [thread:$0]  %s57, 64, %s59, [#allocation9]
    $region17: #{tpu_custom_call.1} parent=1 // pred_fallthru
      _
    // Predicated region
    $region18: #{tpu_custom_call.1} parent=1 // pred_check
      _
    $region19: #{tpu_custom_call.1} parent=1 // pred_check_branch
      %63 = sbr.rel (0) target = $region21
    $region20: #{tpu_custom_call.1} parent=1 // pred_region
      %65 = vsyncadd [#allocation9], 0
      %s67 = sshll.u32 %s4, 4
      %s68 = int_to_ptr.hbm [resolvable:$true] %s67
      %s69 = sshll.u32 [#allocation10], 4
      %s70 = int_to_ptr.vmem [resolvable:$true] %s69
      %72 = dma.hbm_to_vmem [thread:$0]  %s68, 64, %s70, [#allocation9]
    $region21: #{tpu_custom_call.1} parent=1 // pred_fallthru
      _
    // Predicated region
    $region22: #{tpu_custom_call.1} parent=1 // pred_check
      _
    $region23: #{tpu_custom_call.1} parent=1 // pred_check_branch
      %74 = sbr.rel (0) target = $region25
    $region24: #{tpu_custom_call.1} parent=1 // pred_region
      %76 = dma.done [#allocation3], 512
    $region25: #{tpu_custom_call.1} parent=1 // pred_fallthru
      _
    // Predicated region
    $region26: #{tpu_custom_call.1} parent=1 // pred_check
      _
    $region27: #{tpu_custom_call.1} parent=1 // pred_check_branch
      %78 = sbr.rel (0) target = $region29
    $region28: #{tpu_custom_call.1} parent=1 // pred_region
      %80 = dma.done [#allocation6], 8192
    $region29: #{tpu_custom_call.1} parent=1 // pred_fallthru
      _
    // Predicated region
    $region30: #{tpu_custom_call.1} parent=1 // pred_check
      _
    $region31: #{tpu_custom_call.1} parent=1 // pred_check_branch
      %82 = sbr.rel (0) target = $region33
    $region32: #{tpu_custom_call.1} parent=1 // pred_region
      %84 = dma.done [#allocation6], 64
    $region33: #{tpu_custom_call.1} parent=1 // pred_fallthru
      _
    // Predicated region
    $region34: #{tpu_custom_call.1} parent=1 // pred_check
      _
    $region35: #{tpu_custom_call.1} parent=1 // pred_check_branch
      %86 = sbr.rel (0) target = $region37
    $region36: #{tpu_custom_call.1} parent=1 // pred_region
      %88 = dma.done [#allocation9], 64
    $region37: #{tpu_custom_call.1} parent=1 // pred_fallthru
      _
    // Predicated region
    $region38: #{tpu_custom_call.1} parent=1 // pred_check
      _
    $region39: #{tpu_custom_call.1} parent=1 // pred_check_branch
      %90 = sbr.rel (0) target = $region41
    $region40: #{tpu_custom_call.1} parent=1 // pred_region
      %92 = dma.done [#allocation9], 64
    $region41: #{tpu_custom_call.1} parent=1 // pred_fallthru
      _
    %v93 = vld [vmem:[#allocation2] sm:$0xff]
    %v94 = vld [vmem:[#allocation2 + $0x8] sm:$0xff]
    %v95 = vld [vmem:[#allocation2 + $0x10] sm:$0xff]
    %v96 = vld [vmem:[#allocation2 + $0x18] sm:$0xff]
    %v97 = vpack.c.bf16 %v95, %v93
    %v98 = vpack.c.bf16 %v96, %v94
    %v99 = vld [vmem:[#allocation5] sm:$0xff]
    %v100 = vld [vmem:[#allocation5 + $0x8] sm:$0xff]
    %v101 = vld [vmem:[#allocation5 + $0x10] sm:$0xff]
    %v102 = vld [vmem:[#allocation5 + $0x18] sm:$0xff]
    %v103 = vld [vmem:[#allocation5 + $0x20] sm:$0xff]
    %v104 = vld [vmem:[#allocation5 + $0x28] sm:$0xff]
    %v105 = vld [vmem:[#allocation5 + $0x30] sm:$0xff]
    %v106 = vld [vmem:[#allocation5 + $0x38] sm:$0xff]
    %v107 = vld [vmem:[#allocation5 + $0x40] sm:$0xff]
    %v108 = vld [vmem:[#allocation5 + $0x48] sm:$0xff]
    %v109 = vld [vmem:[#allocation5 + $0x50] sm:$0xff]
    %v110 = vld [vmem:[#allocation5 + $0x58] sm:$0xff]
    %v111 = vld [vmem:[#allocation5 + $0x60] sm:$0xff]
    %v112 = vld [vmem:[#allocation5 + $0x68] sm:$0xff]
    %v113 = vld [vmem:[#allocation5 + $0x70] sm:$0xff]
    %v114 = vld [vmem:[#allocation5 + $0x78] sm:$0xff]
    %v115 = vld [vmem:[#allocation5 + $0x80] sm:$0xff]
    %v116 = vld [vmem:[#allocation5 + $0x88] sm:$0xff]
    %v117 = vld [vmem:[#allocation5 + $0x90] sm:$0xff]
    %v118 = vld [vmem:[#allocation5 + $0x98] sm:$0xff]
    %v119 = vld [vmem:[#allocation5 + $0xa0] sm:$0xff]
    %v120 = vld [vmem:[#allocation5 + $0xa8] sm:$0xff]
    %v121 = vld [vmem:[#allocation5 + $0xb0] sm:$0xff]
    %v122 = vld [vmem:[#allocation5 + $0xb8] sm:$0xff]
    %v123 = vld [vmem:[#allocation5 + $0xc0] sm:$0xff]
    %v124 = vld [vmem:[#allocation5 + $0xc8] sm:$0xff]
    %v125 = vld [vmem:[#allocation5 + $0xd0] sm:$0xff]
    %v126 = vld [vmem:[#allocation5 + $0xd8] sm:$0xff]
    %v127 = vld [vmem:[#allocation5 + $0xe0] sm:$0xff]
    %v128 = vld [vmem:[#allocation5 + $0xe8] sm:$0xff]
    %v129 = vld [vmem:[#allocation5 + $0xf0] sm:$0xff]
    %v130 = vld [vmem:[#allocation5 + $0xf8] sm:$0xff]
    %v131 = vld [vmem:[#allocation5 + $0x100] sm:$0xff]
    %v132 = vld [vmem:[#allocation5 + $0x108] sm:$0xff]
    %v133 = vld [vmem:[#allocation5 + $0x110] sm:$0xff]
    %v134 = vld [vmem:[#allocation5 + $0x118] sm:$0xff]
    %v135 = vld [vmem:[#allocation5 + $0x120] sm:$0xff]
    %v136 = vld [vmem:[#allocation5 + $0x128] sm:$0xff]
    %v137 = vld [vmem:[#allocation5 + $0x130] sm:$0xff]
    %v138 = vld [vmem:[#allocation5 + $0x138] sm:$0xff]
    %v139 = vld [vmem:[#allocation5 + $0x140] sm:$0xff]
    %v140 = vld [vmem:[#allocation5 + $0x148] sm:$0xff]
    %v141 = vld [vmem:[#allocation5 + $0x150] sm:$0xff]
    %v142 = vld [vmem:[#allocation5 + $0x158] sm:$0xff]
    %v143 = vld [vmem:[#allocation5 + $0x160] sm:$0xff]
    %v144 = vld [vmem:[#allocation5 + $0x168] sm:$0xff]
    %v145 = vld [vmem:[#allocation5 + $0x170] sm:$0xff]
    %v146 = vld [vmem:[#allocation5 + $0x178] sm:$0xff]
    %v147 = vld [vmem:[#allocation5 + $0x180] sm:$0xff]
    %v148 = vld [vmem:[#allocation5 + $0x188] sm:$0xff]
    %v149 = vld [vmem:[#allocation5 + $0x190] sm:$0xff]
    %v150 = vld [vmem:[#allocation5 + $0x198] sm:$0xff]
    %v151 = vld [vmem:[#allocation5 + $0x1a0] sm:$0xff]
    %v152 = vld [vmem:[#allocation5 + $0x1a8] sm:$0xff]
    %v153 = vld [vmem:[#allocation5 + $0x1b0] sm:$0xff]
    %v154 = vld [vmem:[#allocation5 + $0x1b8] sm:$0xff]
    %v155 = vld [vmem:[#allocation5 + $0x1c0] sm:$0xff]
    %v156 = vld [vmem:[#allocation5 + $0x1c8] sm:$0xff]
    %v157 = vld [vmem:[#allocation5 + $0x1d0] sm:$0xff]
    %v158 = vld [vmem:[#allocation5 + $0x1d8] sm:$0xff]
    %v159 = vld [vmem:[#allocation5 + $0x1e0] sm:$0xff]
    %v160 = vld [vmem:[#allocation5 + $0x1e8] sm:$0xff]
    %v161 = vld [vmem:[#allocation5 + $0x1f0] sm:$0xff]
    %v162 = vld [vmem:[#allocation5 + $0x1f8] sm:$0xff]
    %v163 = vld [vmem:[#allocation7] sm:$0xf]
    %v165 = vperm.slane %v163, 0
    %v166 = vperm.slane %v163, 1
    %v167 = vperm.slane %v163, 2
    %v168 = vperm.slane %v163, 3
    %v237 = vunpack.c.l.b16 %v99
    %v238 = vunpack.c.h.b16 %v99
    %v239 = vunpack.c.l.b16 %v100
    %v240 = vunpack.c.h.b16 %v100
    %v241 = vunpack.c.l.b16 %v101
    %v242 = vunpack.c.h.b16 %v101
    %v243 = vunpack.c.l.b16 %v102
    %v244 = vunpack.c.h.b16 %v102
    %v245 = vunpack.c.l.b16 %v103
    %v246 = vunpack.c.h.b16 %v103
    %v247 = vunpack.c.l.b16 %v104
    %v248 = vunpack.c.h.b16 %v104
    %v249 = vunpack.c.l.b16 %v105
    %v250 = vunpack.c.h.b16 %v105
    %v251 = vunpack.c.l.b16 %v106
    %v252 = vunpack.c.h.b16 %v106
    %v253 = vunpack.c.l.b16 %v107
    %v254 = vunpack.c.h.b16 %v107
    %v255 = vunpack.c.l.b16 %v108
    %v256 = vunpack.c.h.b16 %v108
    %v257 = vunpack.c.l.b16 %v109
    %v258 = vunpack.c.h.b16 %v109
    %v259 = vunpack.c.l.b16 %v110
    %v260 = vunpack.c.h.b16 %v110
    %v261 = vunpack.c.l.b16 %v111
    %v262 = vunpack.c.h.b16 %v111
    %v263 = vunpack.c.l.b16 %v112
    %v264 = vunpack.c.h.b16 %v112
    %v265 = vunpack.c.l.b16 %v113
    %v266 = vunpack.c.h.b16 %v113
    %v267 = vunpack.c.l.b16 %v114
    %v268 = vunpack.c.h.b16 %v114
    %v269 = vunpack.c.l.b16 %v115
    %v270 = vunpack.c.h.b16 %v115
    %v271 = vunpack.c.l.b16 %v116
    %v272 = vunpack.c.h.b16 %v116
    %v273 = vunpack.c.l.b16 %v117
    %v274 = vunpack.c.h.b16 %v117
    %v275 = vunpack.c.l.b16 %v118
    %v276 = vunpack.c.h.b16 %v118
    %v277 = vunpack.c.l.b16 %v119
    %v278 = vunpack.c.h.b16 %v119
    %v279 = vunpack.c.l.b16 %v120
    %v280 = vunpack.c.h.b16 %v120
    %v281 = vunpack.c.l.b16 %v121
    %v282 = vunpack.c.h.b16 %v121
    %v283 = vunpack.c.l.b16 %v122
    %v284 = vunpack.c.h.b16 %v122
    %v285 = vunpack.c.l.b16 %v123
    %v286 = vunpack.c.h.b16 %v123
    %v287 = vunpack.c.l.b16 %v124
    %v288 = vunpack.c.h.b16 %v124
    %v289 = vunpack.c.l.b16 %v125
    %v290 = vunpack.c.h.b16 %v125
    %v291 = vunpack.c.l.b16 %v126
    %v292 = vunpack.c.h.b16 %v126
    %v293 = vunpack.c.l.b16 %v127
    %v294 = vunpack.c.h.b16 %v127
    %v295 = vunpack.c.l.b16 %v128
    %v296 = vunpack.c.h.b16 %v128
    %v297 = vunpack.c.l.b16 %v129
    %v298 = vunpack.c.h.b16 %v129
    %v299 = vunpack.c.l.b16 %v130
    %v300 = vunpack.c.h.b16 %v130
    %v301 = vunpack.c.l.b16 %v131
    %v302 = vunpack.c.h.b16 %v131
    %v303 = vunpack.c.l.b16 %v132
    %v304 = vunpack.c.h.b16 %v132
    %v305 = vunpack.c.l.b16 %v133
    %v306 = vunpack.c.h.b16 %v133
    %v307 = vunpack.c.l.b16 %v134
    %v308 = vunpack.c.h.b16 %v134
    %v309 = vunpack.c.l.b16 %v135
    %v310 = vunpack.c.h.b16 %v135
    %v311 = vunpack.c.l.b16 %v136
    %v312 = vunpack.c.h.b16 %v136
    %v313 = vunpack.c.l.b16 %v137
    %v314 = vunpack.c.h.b16 %v137
    %v315 = vunpack.c.l.b16 %v138
    %v316 = vunpack.c.h.b16 %v138
    %v317 = vunpack.c.l.b16 %v139
    %v318 = vunpack.c.h.b16 %v139
    %v319 = vunpack.c.l.b16 %v140
    %v320 = vunpack.c.h.b16 %v140
    %v321 = vunpack.c.l.b16 %v141
    %v322 = vunpack.c.h.b16 %v141
    %v323 = vunpack.c.l.b16 %v142
    %v324 = vunpack.c.h.b16 %v142
    %v325 = vunpack.c.l.b16 %v143
    %v326 = vunpack.c.h.b16 %v143
    %v327 = vunpack.c.l.b16 %v144
    %v328 = vunpack.c.h.b16 %v144
    %v329 = vunpack.c.l.b16 %v145
    %v330 = vunpack.c.h.b16 %v145
    %v331 = vunpack.c.l.b16 %v146
    %v332 = vunpack.c.h.b16 %v146
    %v333 = vunpack.c.l.b16 %v147
    %v334 = vunpack.c.h.b16 %v147
    %v335 = vunpack.c.l.b16 %v148
    %v336 = vunpack.c.h.b16 %v148
    %v337 = vunpack.c.l.b16 %v149
    %v338 = vunpack.c.h.b16 %v149
    %v339 = vunpack.c.l.b16 %v150
    %v340 = vunpack.c.h.b16 %v150
    %v341 = vunpack.c.l.b16 %v151
    %v342 = vunpack.c.h.b16 %v151
    %v343 = vunpack.c.l.b16 %v152
    %v344 = vunpack.c.h.b16 %v152
    %v345 = vunpack.c.l.b16 %v153
    %v346 = vunpack.c.h.b16 %v153
    %v347 = vunpack.c.l.b16 %v154
    %v348 = vunpack.c.h.b16 %v154
    %v349 = vunpack.c.l.b16 %v155
    %v350 = vunpack.c.h.b16 %v155
    %v351 = vunpack.c.l.b16 %v156
    %v352 = vunpack.c.h.b16 %v156
    %v353 = vunpack.c.l.b16 %v157
    %v354 = vunpack.c.h.b16 %v157
    %v355 = vunpack.c.l.b16 %v158
    %v356 = vunpack.c.h.b16 %v158
    %v357 = vunpack.c.l.b16 %v159
    %v358 = vunpack.c.h.b16 %v159
    %v359 = vunpack.c.l.b16 %v160
    %v360 = vunpack.c.h.b16 %v160
    %v361 = vunpack.c.l.b16 %v161
    %v362 = vunpack.c.h.b16 %v161
    %v363 = vunpack.c.l.b16 %v162
    %v364 = vunpack.c.h.b16 %v162
    %v365 = vpack.c.b16 %v241, %v237
    %v366 = vpack.c.b16 %v242, %v238
    %v367 = vpack.c.b16 %v243, %v239
    %v368 = vpack.c.b16 %v244, %v240
    %v369 = vpack.c.b16 %v249, %v245
    %v370 = vpack.c.b16 %v250, %v246
    %v371 = vpack.c.b16 %v251, %v247
    %v372 = vpack.c.b16 %v252, %v248
    %v373 = vpack.c.b16 %v257, %v253
    %v374 = vpack.c.b16 %v258, %v254
    %v375 = vpack.c.b16 %v259, %v255
    %v376 = vpack.c.b16 %v260, %v256
    %v377 = vpack.c.b16 %v265, %v261
    %v378 = vpack.c.b16 %v266, %v262
    %v379 = vpack.c.b16 %v267, %v263
    %v380 = vpack.c.b16 %v268, %v264
    %v381 = vpack.c.b16 %v273, %v269
    %v382 = vpack.c.b16 %v274, %v270
    %v383 = vpack.c.b16 %v275, %v271
    %v384 = vpack.c.b16 %v276, %v272
    %v385 = vpack.c.b16 %v281, %v277
    %v386 = vpack.c.b16 %v282, %v278
    %v387 = vpack.c.b16 %v283, %v279
    %v388 = vpack.c.b16 %v284, %v280
    %v389 = vpack.c.b16 %v289, %v285
    %v390 = vpack.c.b16 %v290, %v286
    %v391 = vpack.c.b16 %v291, %v287
    %v392 = vpack.c.b16 %v292, %v288
    %v393 = vpack.c.b16 %v297, %v293
    %v394 = vpack.c.b16 %v298, %v294
    %v395 = vpack.c.b16 %v299, %v295
    %v396 = vpack.c.b16 %v300, %v296
    %v397 = vpack.c.b16 %v305, %v301
    %v398 = vpack.c.b16 %v306, %v302
    %v399 = vpack.c.b16 %v307, %v303
    %v400 = vpack.c.b16 %v308, %v304
    %v401 = vpack.c.b16 %v313, %v309
    %v402 = vpack.c.b16 %v314, %v310
    %v403 = vpack.c.b16 %v315, %v311
    %v404 = vpack.c.b16 %v316, %v312
    %v405 = vpack.c.b16 %v321, %v317
    %v406 = vpack.c.b16 %v322, %v318
    %v407 = vpack.c.b16 %v323, %v319
    %v408 = vpack.c.b16 %v324, %v320
    %v409 = vpack.c.b16 %v329, %v325
    %v410 = vpack.c.b16 %v330, %v326
    %v411 = vpack.c.b16 %v331, %v327
    %v412 = vpack.c.b16 %v332, %v328
    %v413 = vpack.c.b16 %v337, %v333
    %v414 = vpack.c.b16 %v338, %v334
    %v415 = vpack.c.b16 %v339, %v335
    %v416 = vpack.c.b16 %v340, %v336
    %v417 = vpack.c.b16 %v345, %v341
    %v418 = vpack.c.b16 %v346, %v342
    %v419 = vpack.c.b16 %v347, %v343
    %v420 = vpack.c.b16 %v348, %v344
    %v421 = vpack.c.b16 %v353, %v349
    %v422 = vpack.c.b16 %v354, %v350
    %v423 = vpack.c.b16 %v355, %v351
    %v424 = vpack.c.b16 %v356, %v352
    %v425 = vpack.c.b16 %v361, %v357
    %v426 = vpack.c.b16 %v362, %v358
    %v427 = vpack.c.b16 %v363, %v359
    %v428 = vpack.c.b16 %v364, %v360
    %493 = vmatpush.bf16.msra.mxu0 %v393
    %494 = vmatpush.bf16.msra.mxu0 %v389
    %495 = vmatpush.bf16.msra.mxu0 %v385
    %496 = vmatpush.bf16.msra.mxu0 %v381
    %497 = vmatpush.bf16.msra.mxu0 %v377
    %498 = vmatpush.bf16.msra.mxu0 %v373
    %499 = vmatpush.bf16.msra.mxu0 %v369
    %500 = vmatpush.bf16.msra.mxu0 %v365
    %501 = vmatmul.bf16.gmra.mxu0 %v97
    %v502 = vpop.f32.mrf.mxu0
    %v503 = vadd.f32 %v165, %v502
    %v504 = vpop.f32.mrf.mxu0
    %v505 = vadd.f32 %v165, %v504
    %506 = vdwg.mxu0
    %507 = vmatpush.bf16.msra.mxu0 %v425
    %508 = vmatpush.bf16.msra.mxu0 %v421
    %509 = vmatpush.bf16.msra.mxu0 %v417
    %510 = vmatpush.bf16.msra.mxu0 %v413
    %511 = vmatpush.bf16.msra.mxu0 %v409
    %512 = vmatpush.bf16.msra.mxu0 %v405
    %513 = vmatpush.bf16.msra.mxu0 %v401
    %514 = vmatpush.bf16.msra.mxu0 %v397
    %515 = vmatmul.bf16.gmra.mxu0 %v98
    %v516 = vpop.f32.mrf.mxu0
    %v517 = vadd.f32 %v503, %v516
    %v518 = vpop.f32.mrf.mxu0
    %v519 = vadd.f32 %v505, %v518
    %520 = vdwg.mxu0
    %521 = vmatpush.bf16.msra.mxu0 %v394
    %522 = vmatpush.bf16.msra.mxu0 %v390
    %523 = vmatpush.bf16.msra.mxu0 %v386
    %524 = vmatpush.bf16.msra.mxu0 %v382
    %525 = vmatpush.bf16.msra.mxu0 %v378
    %526 = vmatpush.bf16.msra.mxu0 %v374
    %527 = vmatpush.bf16.msra.mxu0 %v370
    %528 = vmatpush.bf16.msra.mxu0 %v366
    %529 = vmatmul.bf16.gmra.mxu0 %v97
    %v530 = vpop.f32.mrf.mxu0
    %v531 = vadd.f32 %v166, %v530
    %v532 = vpop.f32.mrf.mxu0
    %v533 = vadd.f32 %v166, %v532
    %534 = vdwg.mxu0
    %535 = vmatpush.bf16.msra.mxu0 %v426
    %536 = vmatpush.bf16.msra.mxu0 %v422
    %537 = vmatpush.bf16.msra.mxu0 %v418
    %538 = vmatpush.bf16.msra.mxu0 %v414
    %539 = vmatpush.bf16.msra.mxu0 %v410
    %540 = vmatpush.bf16.msra.mxu0 %v406
    %541 = vmatpush.bf16.msra.mxu0 %v402
    %542 = vmatpush.bf16.msra.mxu0 %v398
    %543 = vmatmul.bf16.gmra.mxu0 %v98
    %v544 = vpop.f32.mrf.mxu0
    %v545 = vadd.f32 %v531, %v544
    %v546 = vpop.f32.mrf.mxu0
    %v547 = vadd.f32 %v533, %v546
    %548 = vdwg.mxu0
    %549 = vmatpush.bf16.msra.mxu0 %v395
    %550 = vmatpush.bf16.msra.mxu0 %v391
    %551 = vmatpush.bf16.msra.mxu0 %v387
    %552 = vmatpush.bf16.msra.mxu0 %v383
    %553 = vmatpush.bf16.msra.mxu0 %v379
    %554 = vmatpush.bf16.msra.mxu0 %v375
    %555 = vmatpush.bf16.msra.mxu0 %v371
    %556 = vmatpush.bf16.msra.mxu0 %v367
    %557 = vmatmul.bf16.gmra.mxu0 %v97
    %v558 = vpop.f32.mrf.mxu0
    %v559 = vadd.f32 %v167, %v558
    %v560 = vpop.f32.mrf.mxu0
    %v561 = vadd.f32 %v167, %v560
    %562 = vdwg.mxu0
    %563 = vmatpush.bf16.msra.mxu0 %v427
    %564 = vmatpush.bf16.msra.mxu0 %v423
    %565 = vmatpush.bf16.msra.mxu0 %v419
    %566 = vmatpush.bf16.msra.mxu0 %v415
    %567 = vmatpush.bf16.msra.mxu0 %v411
    %568 = vmatpush.bf16.msra.mxu0 %v407
    %569 = vmatpush.bf16.msra.mxu0 %v403
    %570 = vmatpush.bf16.msra.mxu0 %v399
    %571 = vmatmul.bf16.gmra.mxu0 %v98
    %v572 = vpop.f32.mrf.mxu0
    %v573 = vadd.f32 %v559, %v572
    %v574 = vpop.f32.mrf.mxu0
    %v575 = vadd.f32 %v561, %v574
    %576 = vdwg.mxu0
    %577 = vmatpush.bf16.msra.mxu0 %v396
    %578 = vmatpush.bf16.msra.mxu0 %v392
    %579 = vmatpush.bf16.msra.mxu0 %v388
    %580 = vmatpush.bf16.msra.mxu0 %v384
    %581 = vmatpush.bf16.msra.mxu0 %v380
    %582 = vmatpush.bf16.msra.mxu0 %v376
    %583 = vmatpush.bf16.msra.mxu0 %v372
    %584 = vmatpush.bf16.msra.mxu0 %v368
    %585 = vmatmul.bf16.gmra.mxu0 %v97
    %v586 = vpop.f32.mrf.mxu0
    %v587 = vadd.f32 %v168, %v586
    %v588 = vpop.f32.mrf.mxu0
    %v589 = vadd.f32 %v168, %v588
    %590 = vdwg.mxu0
    %591 = vmatpush.bf16.msra.mxu0 %v428
    %592 = vmatpush.bf16.msra.mxu0 %v424
    %593 = vmatpush.bf16.msra.mxu0 %v420
    %594 = vmatpush.bf16.msra.mxu0 %v416
    %595 = vmatpush.bf16.msra.mxu0 %v412
    %596 = vmatpush.bf16.msra.mxu0 %v408
    %597 = vmatpush.bf16.msra.mxu0 %v404
    %598 = vmatpush.bf16.msra.mxu0 %v400
    %599 = vmatmul.bf16.gmra.mxu0 %v98
    %v600 = vpop.f32.mrf.mxu0
    %v601 = vadd.f32 %v587, %v600
    %v602 = vpop.f32.mrf.mxu0
    %v603 = vadd.f32 %v589, %v602
    %604 = vdwg.mxu0
    %605 = vadd.xlane.f32.xlu0 %v517
    %v606 = vpop.xlane.xlu0 %605
    %607 = vadd.xlane.f32.xlu0 %v519
    %v608 = vpop.xlane.xlu0 %607
    %v609 = vrcp.pop 128.0
    %v610 = vmul.f32 128.0, %v609
    %v611 = vsub.f32 1.0, %v610
    %v612 = vmul.f32 %v609, %v611
    %v613 = vadd.f32 %v609, %v612
    %vm614 = vweird.f32 %v609
    %v615 = vsel %vm614, %v609, %v613
    %v616 = vmul.f32 %v606, %v615
    %v617 = vmul.f32 %v608, %v615
    %v618 = vsub.f32 %v517, %v616
    %v619 = vsub.f32 %v519, %v617
    %v620 = vmul.f32 %v618, %v618
    %v621 = vmul.f32 %v619, %v619
    %622 = vadd.xlane.f32.xlu0 %v620
    %v623 = vpop.xlane.xlu0 %622
    %624 = vadd.xlane.f32.xlu0 %v621
    %v625 = vpop.xlane.xlu0 %624
    %v626 = vmul.f32 %v623, %v615
    %v627 = vmul.f32 %v625, %v615
    %v628 = vadd.f32 %v626, 1e-05
    %v629 = vadd.f32 %v627, 1e-05
    %v630 = vrsqrt.pop %v628
    %v631 = vmul.f32 %v630, %v628
    %v632 = vmul.f32 %v631, %v630
    %v633 = vmul.f32 0.5, %v632
    %v634 = vsub.f32 1.5, %v633
    %v635 = vmul.f32 %v630, %v634
    %vm636 = vweird.f32 %v628
    %vm637 = vweird.f32 %v630
    %vm638 = vmor %vm636, %vm637
    %v639 = vsel %vm638, %v630, %v635
    %v640 = vrsqrt.pop %v629
    %v641 = vmul.f32 %v640, %v629
    %v642 = vmul.f32 %v641, %v640
    %v643 = vmul.f32 0.5, %v642
    %v644 = vsub.f32 1.5, %v643
    %v645 = vmul.f32 %v640, %v644
    %vm646 = vweird.f32 %v629
    %vm647 = vweird.f32 %v640
    %vm648 = vmor %vm646, %vm647
    %v649 = vsel %vm648, %v640, %v645
    %v650 = vmul.f32 %v618, %v639
    %v651 = vmul.f32 %v619, %v649
    %652 = vadd.xlane.f32.xlu0 %v545
    %v653 = vpop.xlane.xlu0 %652
    %654 = vadd.xlane.f32.xlu0 %v547
    %v655 = vpop.xlane.xlu0 %654
    %v656 = vmul.f32 %v653, %v615
    %v657 = vmul.f32 %v655, %v615
    %v658 = vsub.f32 %v545, %v656
    %v659 = vsub.f32 %v547, %v657
    %v660 = vmul.f32 %v658, %v658
    %v661 = vmul.f32 %v659, %v659
    %662 = vadd.xlane.f32.xlu0 %v660
    %v663 = vpop.xlane.xlu0 %662
    %664 = vadd.xlane.f32.xlu0 %v661
    %v665 = vpop.xlane.xlu0 %664
    %v666 = vmul.f32 %v663, %v615
    %v667 = vmul.f32 %v665, %v615
    %v668 = vadd.f32 %v666, 1e-05
    %v669 = vadd.f32 %v667, 1e-05
    %v670 = vrsqrt.pop %v668
    %v671 = vmul.f32 %v670, %v668
    %v672 = vmul.f32 %v671, %v670
    %v673 = vmul.f32 0.5, %v672
    %v674 = vsub.f32 1.5, %v673
    %v675 = vmul.f32 %v670, %v674
    %vm676 = vweird.f32 %v668
    %vm677 = vweird.f32 %v670
    %vm678 = vmor %vm676, %vm677
    %v679 = vsel %vm678, %v670, %v675
    %v680 = vrsqrt.pop %v669
    %v681 = vmul.f32 %v680, %v669
    %v682 = vmul.f32 %v681, %v680
    %v683 = vmul.f32 0.5, %v682
    %v684 = vsub.f32 1.5, %v683
    %v685 = vmul.f32 %v680, %v684
    %vm686 = vweird.f32 %v669
    %vm687 = vweird.f32 %v680
    %vm688 = vmor %vm686, %vm687
    %v689 = vsel %vm688, %v680, %v685
    %v690 = vmul.f32 %v658, %v679
    %v691 = vmul.f32 %v659, %v689
    %692 = vadd.xlane.f32.xlu0 %v573
    %v693 = vpop.xlane.xlu0 %692
    %694 = vadd.xlane.f32.xlu0 %v575
    %v695 = vpop.xlane.xlu0 %694
    %v696 = vmul.f32 %v693, %v615
    %v697 = vmul.f32 %v695, %v615
    %v698 = vsub.f32 %v573, %v696
    %v699 = vsub.f32 %v575, %v697
    %v700 = vmul.f32 %v698, %v698
    %v701 = vmul.f32 %v699, %v699
    %702 = vadd.xlane.f32.xlu0 %v700
    %v703 = vpop.xlane.xlu0 %702
    %704 = vadd.xlane.f32.xlu0 %v701
    %v705 = vpop.xlane.xlu0 %704
    %v706 = vmul.f32 %v703, %v615
    %v707 = vmul.f32 %v705, %v615
    %v708 = vadd.f32 %v706, 1e-05
    %v709 = vadd.f32 %v707, 1e-05
    %v710 = vrsqrt.pop %v708
    %v711 = vmul.f32 %v710, %v708
    %v712 = vmul.f32 %v711, %v710
    %v713 = vmul.f32 0.5, %v712
    %v714 = vsub.f32 1.5, %v713
    %v715 = vmul.f32 %v710, %v714
    %vm716 = vweird.f32 %v708
    %vm717 = vweird.f32 %v710
    %vm718 = vmor %vm716, %vm717
    %v719 = vsel %vm718, %v710, %v715
    %v720 = vrsqrt.pop %v709
    %v721 = vmul.f32 %v720, %v709
    %v722 = vmul.f32 %v721, %v720
    %v723 = vmul.f32 0.5, %v722
    %v724 = vsub.f32 1.5, %v723
    %v725 = vmul.f32 %v720, %v724
    %vm726 = vweird.f32 %v709
    %vm727 = vweird.f32 %v720
    %vm728 = vmor %vm726, %vm727
    %v729 = vsel %vm728, %v720, %v725
    %v730 = vmul.f32 %v698, %v719
    %v731 = vmul.f32 %v699, %v729
    %732 = vadd.xlane.f32.xlu0 %v601
    %v733 = vpop.xlane.xlu0 %732
    %734 = vadd.xlane.f32.xlu0 %v603
    %v735 = vpop.xlane.xlu0 %734
    %v736 = vmul.f32 %v733, %v615
    %v737 = vmul.f32 %v735, %v615
    %v738 = vsub.f32 %v601, %v736
    %v739 = vsub.f32 %v603, %v737
    %v740 = vmul.f32 %v738, %v738
    %v741 = vmul.f32 %v739, %v739
    %742 = vadd.xlane.f32.xlu0 %v740
    %v743 = vpop.xlane.xlu0 %742
    %744 = vadd.xlane.f32.xlu0 %v741
    %v745 = vpop.xlane.xlu0 %744
    %v746 = vmul.f32 %v743, %v615
    %v747 = vmul.f32 %v745, %v615
    %v748 = vadd.f32 %v746, 1e-05
    %v749 = vadd.f32 %v747, 1e-05
    %v750 = vrsqrt.pop %v748
    %v751 = vmul.f32 %v750, %v748
    %v752 = vmul.f32 %v751, %v750
    %v753 = vmul.f32 0.5, %v752
    %v754 = vsub.f32 1.5, %v753
    %v755 = vmul.f32 %v750, %v754
    %vm756 = vweird.f32 %v748
    %vm757 = vweird.f32 %v750
    %vm758 = vmor %vm756, %vm757
    %v759 = vsel %vm758, %v750, %v755
    %v760 = vrsqrt.pop %v749
    %v761 = vmul.f32 %v760, %v749
    %v762 = vmul.f32 %v761, %v760
    %v763 = vmul.f32 0.5, %v762
    %v764 = vsub.f32 1.5, %v763
    %v765 = vmul.f32 %v760, %v764
    %vm766 = vweird.f32 %v749
    %vm767 = vweird.f32 %v760
    %vm768 = vmor %vm766, %vm767
    %v769 = vsel %vm768, %v760, %v765
    %v770 = vmul.f32 %v738, %v759
    %v771 = vmul.f32 %v739, %v769
    %v772 = vld [vmem:[#allocation8] sm:$0xf]
    %v774 = vperm.slane %v772, 0
    %v775 = vperm.slane %v772, 1
    %v776 = vperm.slane %v772, 2
    %v777 = vperm.slane %v772, 3
    %v782 = vmul.f32 %v650, %v774
    %v783 = vmul.f32 %v690, %v775
    %v784 = vmul.f32 %v730, %v776
    %v785 = vmul.f32 %v770, %v777
    %v786 = vmul.f32 %v651, %v774
    %v787 = vmul.f32 %v691, %v775
    %v788 = vmul.f32 %v731, %v776
    %v789 = vmul.f32 %v771, %v777
    %v790 = vld [vmem:[#allocation10] sm:$0xf]
    %v792 = vperm.slane %v790, 0
    %v793 = vperm.slane %v790, 1
    %v794 = vperm.slane %v790, 2
    %v795 = vperm.slane %v790, 3
    %v800 = vadd.f32 %v782, %v792
    %v801 = vadd.f32 %v783, %v793
    %v802 = vadd.f32 %v784, %v794
    %v803 = vadd.f32 %v785, %v795
    %v804 = vadd.f32 %v786, %v792
    %v805 = vadd.f32 %v787, %v793
    %v806 = vadd.f32 %v788, %v794
    %v807 = vadd.f32 %v789, %v795
    %808 = vst [vmem:[#allocation11] sm:$0xff] %v800
    %809 = vst [vmem:[#allocation11 + $0x8] sm:$0xff] %v801
    %810 = vst [vmem:[#allocation11 + $0x10] sm:$0xff] %v802
    %811 = vst [vmem:[#allocation11 + $0x18] sm:$0xff] %v803
    %812 = vst [vmem:[#allocation11 + $0x20] sm:$0xff] %v804
    %813 = vst [vmem:[#allocation11 + $0x28] sm:$0xff] %v805
    %814 = vst [vmem:[#allocation11 + $0x30] sm:$0xff] %v806
    %815 = vst [vmem:[#allocation11 + $0x38] sm:$0xff] %v807
    // Predicated region
    $region42: #{tpu_custom_call.1} parent=1 // pred_check
      _
    $region43: #{tpu_custom_call.1} parent=1 // pred_check_branch
      %817 = sbr.rel (0) target = $region45
    $region44: #{tpu_custom_call.1} parent=1 // pred_region
      %819 = vsyncadd [#allocation4], 0
      %s820 = sshll.u32 [#allocation11], 4
      %s821 = int_to_ptr.vmem [resolvable:$true] %s820
      %s822 = sshll.u32 %s5, 4
      %s823 = int_to_ptr.hbm [resolvable:$true] %s822
      %828 = dma.vmem_to_hbm [thread:$0]  %s821, 1024, %s823, [#allocation4], 512, 512, 32
    $region45: #{tpu_custom_call.1} parent=1 // pred_fallthru
      _
    // Predicated region
    $region46: #{tpu_custom_call.1} parent=1 // pred_check
      _
    $region47: #{tpu_custom_call.1} parent=1 // pred_check_branch
      %830 = sbr.rel (0) target = $region49
    $region48: #{tpu_custom_call.1} parent=1 // pred_region
      %832 = dma.done [#allocation4], 1024
    $region49: #{tpu_custom_call.1} parent=1 // pred_fallthru
      _
    %833 = vsyncpa [#allocation3], 1
    %834 = vsyncpa [#allocation6], 1
    %835 = vsyncpa [#allocation9], 1
    %836 = vsyncpa [#allocation4], 1

</llo_original>
